<compile_context>
chip_gen: v7x
topology: tpu7x:2x2x1
jax: 0.10.0
libtpu: 0.0.40
codegen_flags: <defaults>
</compile_context>

<pallas_src>
import jax
import jax.numpy as jnp
from jax.experimental import pallas as pl
from jax.experimental.pallas import tpu as pltpu


# ----------------------------------------------------------------------------
# Kernel
# ----------------------------------------------------------------------------
def _make_net2_kernel(num_hidden, out_dim, h0):
    """Fused Net2 forward for one batch tile.

    ref order:
      x_ref                         (TB, D)
      wcat_ref                      (D, H0 + O)   first hidden weight (BN folded) || W_lin
      shift0_ref                    (1, H0)       folded bias+BN shift of first hidden layer
      (w_i, shift_i) * (num_hidden-1)
      wf_ref                        (H_last, O)   final Linear weight of self.net
      bout_ref                      (1, O)        b_lin + b_final (folded)
      y_ref                         (TB, O)
    """

    def kernel(*refs):
        idx = 0
        x_ref = refs[idx]; idx += 1
        wcat_ref = refs[idx]; idx += 1
        shift0_ref = refs[idx]; idx += 1
        rest = []
        for _ in range(num_hidden - 1):
            rest.append((refs[idx], refs[idx + 1]))
            idx += 2
        wf_ref = refs[idx]; idx += 1
        bout_ref = refs[idx]; idx += 1
        y_ref = refs[idx]

        x = x_ref[...]

        # One MXU push feeds both x-consuming layers:
        #   cols [0, H0)       -> first hidden pre-activation (BN scale folded in)
        #   cols [H0, H0 + O)  -> lin(x) (closed-form least-squares Linear), bias folded later
        z = jnp.dot(x, wcat_ref[...], preferred_element_type=jnp.float32)
        lin = z[:, h0:h0 + out_dim]
        h = jnp.maximum(z[:, :h0] + shift0_ref[...], 0.0)   # Linear + BN + ReLU

        # Remaining [Linear -> BatchNorm1d -> ReLU -> Dropout] blocks (BN/bias folded).
        # TODO(synk): Dropout(p=0.2) is identity in eval mode; training-mode
        # stochastic dropout is not implemented here.
        for (w_ref, s_ref) in rest:
            h = jnp.maximum(
                jnp.dot(h, w_ref[...], preferred_element_type=jnp.float32) + s_ref[...],
                0.0)

        mlp = jnp.dot(h, wf_ref[...], preferred_element_type=jnp.float32)
        y_ref[...] = (lin + mlp + bout_ref[...]).astype(y_ref.dtype)

    return kernel


# ----------------------------------------------------------------------------
# Wrapper
# ----------------------------------------------------------------------------
def net2_forward(x, params, *, batch_tile=512):
    """Fused Net2 forward.  Returns (lin(x) + net(x), sig broadcast to batch)."""
    fused = params["fused"]
    num_hidden = fused["num_hidden"]
    out_dim = fused["out_dim"]
    h0 = fused["h0"]

    B, D = x.shape

    # Batch tile: full batch if it is small; otherwise a multiple-of-8 tile so
    # the (8,128) tiling rule is satisfied and batch tiles pipeline/parallelize.
    if B <= batch_tile:
        tb = B
    else:
        tb = max(8, (batch_tile // 8) * 8)
    grid = (pl.cdiv(B, tb),)

    weight_inputs = [fused["W_cat0"], fused["shift0"]]
    for (w, s) in fused["hidden_rest"]:
        weight_inputs += [w, s]
    weight_inputs += [fused["W_final"], fused["b_out"]]

    def resident_spec(arr):
        # Full-array block with constant index map -> stays VMEM-resident
        # across all batch-tile grid steps.
        nd = arr.ndim
        return pl.BlockSpec(arr.shape, lambda i, _nd=nd: (0,) * _nd)

    in_specs = [pl.BlockSpec((tb, D), lambda i: (i, 0))]
    in_specs += [resident_spec(a) for a in weight_inputs]
    out_specs = pl.BlockSpec((tb, out_dim), lambda i: (i, 0))
    out_shape = jax.ShapeDtypeStruct((B, out_dim), jnp.float32)

    # Advisory cost estimate for XLA scheduling around the custom call.
    flops = 2 * B * (
        D * (h0 + out_dim)
        + sum(w.shape[0] * w.shape[1] for (w, _) in fused["hidden_rest"])
        + fused["W_final"].shape[0] * out_dim
    )
    bytes_accessed = 4 * (x.size + B * out_dim + sum(a.size for a in weight_inputs))

    kernel = _make_net2_kernel(num_hidden, out_dim, h0)
    y = pl.pallas_call(
        kernel,
        grid=grid,
        in_specs=in_specs,
        out_specs=out_specs,
        out_shape=out_shape,
        compiler_params=pltpu.CompilerParams(
            dimension_semantics=("parallel",),
        ),
        cost_estimate=pl.CostEstimate(
            flops=flops, transcendentals=0, bytes_accessed=bytes_accessed),
    )(x, *weight_inputs)

    # sig is a constant learned row; broadcast in the wrapper instead of writing
    # a constant slab back from the kernel.
    sig = jnp.broadcast_to(params["sig"], (B, out_dim))
    return y, sig


# ----------------------------------------------------------------------------
# Parameter construction (mirrors Net2.__init__) + host-side folding
# ----------------------------------------------------------------------------
def _fold_params(params):
    """Fold BN scale into weights, biases into shifts, W_lin into the first
    hidden matmul, and b_lin + b_final into a single output bias."""
    hidden = params["hidden"]
    assert len(hidden) >= 1, "fused kernel assumes at least one hidden block"
    out_dim = params["W_final"].shape[1]

    folded = []
    for (W, b, scale, shift) in hidden:
        W_f = W * scale            # column-wise BN scale folded into weights
        s_f = b * scale + shift    # bias + BN shift folded
        folded.append((W_f, s_f))

    W0, s0 = folded[0]
    h0 = W0.shape[1]
    W_cat0 = jnp.concatenate([W0, params["W_lin"]], axis=1)   # (D, H0 + O)
    b_out = params["b_lin"] + params["b_final"]               # (1, O)

    return {
        "num_hidden": len(hidden),
        "out_dim": out_dim,
        "h0": h0,
        "W_cat0": W_cat0,
        "shift0": s0,
        "hidden_rest": folded[1:],
        "W_final": params["W_final"],
        "b_out": b_out,
    }


def init_net2_params(X_data, Y_data, hidden_layer_sizes, key):
    """Deterministic parameter construction mirroring Net2.__init__ (f32)."""
    in_dim = X_data.shape[1]
    out_dim = Y_data.shape[1]
    eps = 1e-5

    # self.lin: closed-form least squares  Theta = (X_^T X_)^-1 X_^T Y
    ones = jnp.ones((X_data.shape[0], 1), jnp.float32)
    X_ = jnp.concatenate([X_data, ones], axis=1)
    Theta = jnp.linalg.solve(X_.T @ X_, X_.T @ Y_data)       # [in_dim+1, out_dim]
    W_lin = Theta[:-1, :]                                     # x @ W form
    b_lin = Theta[-1, :].reshape(1, out_dim)

    layer_sizes = [in_dim] + list(hidden_layer_sizes)
    hidden = []
    for a, b in zip(layer_sizes[:-1], layer_sizes[1:]):
        key, kw, kb = jax.random.split(key, 3)
        bound = 1.0 / jnp.sqrt(a)
        W = jax.random.uniform(kw, (a, b), jnp.float32, -bound, bound)
        bias = jax.random.uniform(kb, (1, b), jnp.float32, -bound, bound)
        # BatchNorm1d default init: gamma=1, beta=0, running_mean=0, running_var=1
        gamma = jnp.ones((1, b), jnp.float32)
        beta = jnp.zeros((1, b), jnp.float32)
        running_mean = jnp.zeros((1, b), jnp.float32)
        running_var = jnp.ones((1, b), jnp.float32)
        scale = gamma / jnp.sqrt(running_var + eps)
        shift = beta - running_mean * scale
        hidden.append((W, bias, scale, shift))

    key, kw, kb = jax.random.split(key, 3)
    last = layer_sizes[-1]
    bound = 1.0 / jnp.sqrt(last)
    W_final = jax.random.uniform(kw, (last, out_dim), jnp.float32, -bound, bound)
    b_final = jax.random.uniform(kb, (1, out_dim), jnp.float32, -bound, bound)

    sig = jnp.ones((1, out_dim), jnp.float32)

    params = {
        "W_lin": W_lin, "b_lin": b_lin,
        "hidden": hidden,
        "W_final": W_final, "b_final": b_final,
        "sig": sig,
    }
    params["fused"] = _fold_params(params)
    return params


def net2_reference(x, params):
    """Plain-JAX reference (unfolded weights) for correctness check."""
    lin = x @ params["W_lin"] + params["b_lin"]
    h = x
    for (w, b, s, t) in params["hidden"]:
        h = jnp.maximum((h @ w + b) * s + t, 0.0)
    mlp = h @ params["W_final"] + params["b_final"]
    y = lin + mlp
    sig = jnp.broadcast_to(params["sig"], (x.shape[0], params["sig"].shape[1]))
    return y, sig


# ----------------------------------------------------------------------------
# Test
# ----------------------------------------------------------------------------
if __name__ == "__main__":
    key = jax.random.PRNGKey(0)
    k_x, k_y, k_in, k_p = jax.random.split(key, 4)

    # synthetic "training data" used only for the closed-form lin init
    N, D, O = 64, 16, 8
    hidden_layer_sizes = [32, 32]
    X_data = jax.random.normal(k_x, (N, D), jnp.float32)
    Y_data = jax.random.normal(k_y, (N, O), jnp.float32)

    params = init_net2_params(X_data, Y_data, hidden_layer_sizes, k_p)

    # forward input (B=16 with batch_tile=8 exercises the batch-tiled grid path)
    B = 16
    x = jax.random.normal(k_in, (B, D), jnp.float32)

    y, sig = net2_forward(x, params, batch_tile=8)
    y = jax.block_until_ready(y)
    sig = jax.block_until_ready(sig)

    y_ref, sig_ref = net2_reference(x, params)
    assert y.shape == (B, O) and sig.shape == (B, O)
    assert jnp.allclose(y, y_ref, atol=1e-4, rtol=1e-4)
    assert jnp.allclose(sig, sig_ref)

    print("KERNEL_OK")
</pallas_src>

<mosaic_0001>
module attributes {stable_mosaic.version = 11 : i64} {
  func.func @kernel(%arg0: i32, %arg1: memref<8x16xf32, #tpu.memory_space<vmem>>, %arg2: memref<16x40xf32, #tpu.memory_space<vmem>>, %arg3: memref<1x32xf32, #tpu.memory_space<vmem>>, %arg4: memref<32x32xf32, #tpu.memory_space<vmem>>, %arg5: memref<1x32xf32, #tpu.memory_space<vmem>>, %arg6: memref<32x8xf32, #tpu.memory_space<vmem>>, %arg7: memref<1x8xf32, #tpu.memory_space<vmem>>, %arg8: memref<8x8xf32, #tpu.memory_space<vmem>>) attributes {dimension_semantics = [#tpu.dimension_semantics<parallel>], iteration_bounds = array<i64: 2>, scalar_prefetch = 0 : i64, scratch_operands = 0 : i64, tpu.core_type = #tpu.core_type<tc>, window_params = [{transform_indices = @transform_0, window_bounds = array<i64: 8, 16>}, {pipeline_mode = #tpu.pipeline_mode<synchronous>, transform_indices = @transform_1, window_bounds = array<i64: 16, 40>}, {pipeline_mode = #tpu.pipeline_mode<synchronous>, transform_indices = @transform_2, window_bounds = array<i64: 1, 32>}, {pipeline_mode = #tpu.pipeline_mode<synchronous>, transform_indices = @transform_3, window_bounds = array<i64: 32, 32>}, {pipeline_mode = #tpu.pipeline_mode<synchronous>, transform_indices = @transform_4, window_bounds = array<i64: 1, 32>}, {pipeline_mode = #tpu.pipeline_mode<synchronous>, transform_indices = @transform_5, window_bounds = array<i64: 32, 8>}, {pipeline_mode = #tpu.pipeline_mode<synchronous>, transform_indices = @transform_6, window_bounds = array<i64: 1, 8>}, {transform_indices = @transform_7, window_bounds = array<i64: 8, 8>}]} {
    %c0 = arith.constant 0 : index
    %c0_0 = arith.constant 0 : index
    %0 = vector.load %arg1[%c0, %c0_0] : memref<8x16xf32, #tpu.memory_space<vmem>>, vector<8x16xf32>
    %c0_1 = arith.constant 0 : index
    %c0_2 = arith.constant 0 : index
    %1 = vector.load %arg2[%c0_1, %c0_2] : memref<16x40xf32, #tpu.memory_space<vmem>>, vector<16x40xf32>
    %cst = arith.constant dense<0.000000e+00> : vector<8x40xf32>
    %2 = tpu.matmul %0, %1, %cst {dimension_numbers = #tpu.dot_dimension_numbers<[1], [0], [0], [1], [0, 0, 1, 1], [], []>} : vector<8x16xf32>, vector<16x40xf32>, vector<8x40xf32> -> vector<8x40xf32>
    %3 = vector.extract_strided_slice %2 {offsets = [0, 32], sizes = [8, 8], strides = [1, 1]} : vector<8x40xf32> to vector<8x8xf32>
    %4 = vector.extract_strided_slice %2 {offsets = [0, 0], sizes = [8, 32], strides = [1, 1]} : vector<8x40xf32> to vector<8x32xf32>
    %c0_3 = arith.constant 0 : index
    %c0_4 = arith.constant 0 : index
    %5 = vector.load %arg3[%c0_3, %c0_4] : memref<1x32xf32, #tpu.memory_space<vmem>>, vector<1x32xf32>
    %6 = vector.broadcast %5 : vector<1x32xf32> to vector<8x32xf32>
    %7 = arith.addf %4, %6 : vector<8x32xf32>
    %cst_5 = arith.constant 0.000000e+00 : f32
    %8 = vector.broadcast %cst_5 : f32 to vector<8x32xf32>
    %9 = arith.maximumf %7, %8 : vector<8x32xf32>
    %c0_6 = arith.constant 0 : index
    %c0_7 = arith.constant 0 : index
    %10 = vector.load %arg4[%c0_6, %c0_7] : memref<32x32xf32, #tpu.memory_space<vmem>>, vector<32x32xf32>
    %cst_8 = arith.constant dense<0.000000e+00> : vector<8x32xf32>
    %11 = tpu.matmul %9, %10, %cst_8 {dimension_numbers = #tpu.dot_dimension_numbers<[1], [0], [0], [1], [0, 0, 1, 1], [], []>} : vector<8x32xf32>, vector<32x32xf32>, vector<8x32xf32> -> vector<8x32xf32>
    %c0_9 = arith.constant 0 : index
    %c0_10 = arith.constant 0 : index
    %12 = vector.load %arg5[%c0_9, %c0_10] : memref<1x32xf32, #tpu.memory_space<vmem>>, vector<1x32xf32>
    %13 = vector.broadcast %12 : vector<1x32xf32> to vector<8x32xf32>
    %14 = arith.addf %11, %13 : vector<8x32xf32>
    %cst_11 = arith.constant 0.000000e+00 : f32
    %15 = vector.broadcast %cst_11 : f32 to vector<8x32xf32>
    %16 = arith.maximumf %14, %15 : vector<8x32xf32>
    %c0_12 = arith.constant 0 : index
    %c0_13 = arith.constant 0 : index
    %17 = vector.load %arg6[%c0_12, %c0_13] : memref<32x8xf32, #tpu.memory_space<vmem>>, vector<32x8xf32>
    %cst_14 = arith.constant dense<0.000000e+00> : vector<8x8xf32>
    %18 = tpu.matmul %16, %17, %cst_14 {dimension_numbers = #tpu.dot_dimension_numbers<[1], [0], [0], [1], [0, 0, 1, 1], [], []>} : vector<8x32xf32>, vector<32x8xf32>, vector<8x8xf32> -> vector<8x8xf32>
    %19 = arith.addf %3, %18 : vector<8x8xf32>
    %c0_15 = arith.constant 0 : index
    %c0_16 = arith.constant 0 : index
    %20 = vector.load %arg7[%c0_15, %c0_16] : memref<1x8xf32, #tpu.memory_space<vmem>>, vector<1x8xf32>
    %21 = vector.broadcast %20 : vector<1x8xf32> to vector<8x8xf32>
    %22 = arith.addf %19, %21 : vector<8x8xf32>
    %c0_17 = arith.constant 0 : index
    %c0_18 = arith.constant 0 : index
    %23 = vector.load %arg8[%c0_17, %c0_18] : memref<8x8xf32, #tpu.memory_space<vmem>>, vector<8x8xf32>
    tpu.vector_store %arg8[%c0_17, %c0_18], %22 {strides = array<i32>} : memref<8x8xf32, #tpu.memory_space<vmem>>, vector<8x8xf32>,
    return
  }
  func.func @transform_0(%arg0: i32) -> (i32, i32) {
    %c0_i32 = arith.constant 0 : i32
    %c0_i32_0 = arith.constant 0 : i32
    return %arg0, %c0_i32 : i32, i32
  }
  func.func @transform_1(%arg0: i32) -> (i32, i32) {
    %c0_i32 = arith.constant 0 : i32
    %c0_i32_0 = arith.constant 0 : i32
    %c0_i32_1 = arith.constant 0 : i32
    return %c0_i32, %c0_i32_0 : i32, i32
  }
  func.func @transform_2(%arg0: i32) -> (i32, i32) {
    %c0_i32 = arith.constant 0 : i32
    %c0_i32_0 = arith.constant 0 : i32
    %c0_i32_1 = arith.constant 0 : i32
    return %c0_i32, %c0_i32_0 : i32, i32
  }
  func.func @transform_3(%arg0: i32) -> (i32, i32) {
    %c0_i32 = arith.constant 0 : i32
    %c0_i32_0 = arith.constant 0 : i32
    %c0_i32_1 = arith.constant 0 : i32
    return %c0_i32, %c0_i32_0 : i32, i32
  }
  func.func @transform_4(%arg0: i32) -> (i32, i32) {
    %c0_i32 = arith.constant 0 : i32
    %c0_i32_0 = arith.constant 0 : i32
    %c0_i32_1 = arith.constant 0 : i32
    return %c0_i32, %c0_i32_0 : i32, i32
  }
  func.func @transform_5(%arg0: i32) -> (i32, i32) {
    %c0_i32 = arith.constant 0 : i32
    %c0_i32_0 = arith.constant 0 : i32
    %c0_i32_1 = arith.constant 0 : i32
    return %c0_i32, %c0_i32_0 : i32, i32
  }
  func.func @transform_6(%arg0: i32) -> (i32, i32) {
    %c0_i32 = arith.constant 0 : i32
    %c0_i32_0 = arith.constant 0 : i32
    %c0_i32_1 = arith.constant 0 : i32
    return %c0_i32, %c0_i32_0 : i32, i32
  }
  func.func @transform_7(%arg0: i32) -> (i32, i32) {
    %c0_i32 = arith.constant 0 : i32
    %c0_i32_0 = arith.constant 0 : i32
    return %arg0, %c0_i32 : i32, i32
  }
}

</mosaic_0001>

<llo_original>
// kernel: tpu_custom_call.1
$region0: #{tpu_custom_call.1}
  #allocation0 [shape = 'u32[]', space=smem, size = 0x4, offset = 0x4, fixed_abs, tag = 'smem constant byte address 0x4 - core index']
  #allocation1 [shape = 'u32[144,128]{1,0:T(1,128)}', space=vmem, size = 0x12000, scoped, tag = 'internal scratch']
  %s0 = inlined_call_operand.vmem [shape: f32[16,16], index: 0, kind: input, shape index: {}]
  %s1 = inlined_call_operand.hbm [shape: f32[16,40], index: 1, kind: input, shape index: {}]
  %s2 = inlined_call_operand.vmem [shape: f32[1,32], index: 2, kind: input, shape index: {}]
  %s3 = inlined_call_operand.vmem [shape: f32[32,32], index: 3, kind: input, shape index: {}]
  %s4 = inlined_call_operand.vmem [shape: f32[1,32], index: 4, kind: input, shape index: {}]
  %s5 = inlined_call_operand.vmem [shape: f32[32,8], index: 5, kind: input, shape index: {}]
  %s6 = inlined_call_operand.vmem [shape: f32[1,8], index: 6, kind: input, shape index: {}]
  %s7 = inlined_call_operand.vmem [shape: f32[16,8], index: 7, kind: output, shape index: {}]
  %s8 = sld [smem:[#allocation0]]
  $region65: #{tpu_custom_call.1} parent=0
    _
  %s10 = ssub.s32 1, %s8
  %s11 = scalar_select 0, %s10, %s8
  $region1: #{tpu_custom_call.1} parent=0
    #allocation2 [shape = 'u8[8192]{0}', space=vmem, size = 0x2000, scoped, tag = 'input window, operand 1, single buffered']
    #allocation3 [shape = 's32[2]{0}', space=sflag, size = 0x8, scoped, tag = 'scoped memory for tpu_custom_call.1']
    %12 = vsyncpa [#allocation3], 0
    loop: start=0, step=1, limit=4
    $region2: #{tpu_custom_call.1} parent=1 // loop_pre_header
      _
    $region3: #{tpu_custom_call.1} parent=1 // loop_header
      %s14 = sphi 0, %s18
      %p15 = scmp.ge.s32.totalorder %s14, 4
      %s24 = sphi 0, %s26
      %s27 = sphi 0, %s24
      %s28 = sphi 0, %s27
      %s44 = sphi 0, %s28
      %s48 = sphi 0, %s48
      %s50 = sphi 0, %s48
      %s51 = sphi 0, %s50
      %s65 = sphi 0, %s51
      %s69 = sphi 0, %s69
      %s71 = sphi 0, %s69
      %s72 = sphi 0, %s71
      %s86 = sphi 0, %s72
      %s90 = sphi 0, %s90
      %s92 = sphi 0, %s90
      %s93 = sphi 0, %s92
      %s107 = sphi 0, %s93
      %s111 = sphi 0, %s111
      %s113 = sphi 0, %s111
      %s114 = sphi 0, %s113
      %s128 = sphi 0, %s114
      %s132 = sphi 0, %s132
      %s134 = sphi 0, %s132
      %s135 = sphi 0, %s134
      %s149 = sphi 0, %s135
      %s153 = sphi 0, %s153
      %s155 = sphi 0, %s153
      %s156 = sphi 0, %s155
      %s170 = sphi 0, %s156
      %s176 = sphi 0, %s178
      %s179 = sphi 0, %s176
      %s180 = sphi 0, %s179
      %s196 = sphi 0, %s180
    $region4: #{tpu_custom_call.1} parent=1 // loop_header_branch
      %17 = sbr.rel (%p15) target = $region8
    $region5: #{tpu_custom_call.1} parent=1 // loop_body
      %s19 = ssub.s32 %s14, 1
      %s20 = ssub.s32 %s14, 2
      %s21 = sadd.s32 %s14, 1
      %s22 = ssub.s32 %s14, %s21
      %p23 = scmp.eq.s32.totalorder %s22, 0
      %s25 = sadd.s32 %s24, 1
      %s26 = scalar_select %p23, %s24, %s25
      %p29 = pneg %p23
      %p30 = scmp.eq.s32.totalorder %s14, 1
      %p31 = por %p29, %p30
      %p32 = scmp.ne.s32.totalorder %s24, %s27
      %p33 = scmp.eq.s32.totalorder %s14, 0
      %p34 = por %p32, %p33
      %p35 = scmp.ne.s32.totalorder %s24, %s27
      %p36 = scmp.eq.s32.totalorder %s19, 1
      %p37 = por %p35, %p36
      %p38 = scmp.ne.s32.totalorder %s27, %s28
      %p39 = scmp.eq.s32.totalorder %s19, 0
      %p40 = por %p38, %p39
      %p41 = scmp.ne.s32.totalorder %s27, %s28
      %p42 = scmp.eq.s32.totalorder %s20, 1
      %p43 = por %p41, %p42
      %p45 = scmp.ne.s32.totalorder %s28, %s44
      %p46 = scmp.eq.s32.totalorder %s20, 0
      %p47 = por %p45, %p46
      %s49 = sadd.s32 %s48, 1
      %p52 = scmp.eq.s32.totalorder %s14, 1
      %p53 = scmp.ne.s32.totalorder %s48, %s50
      %p54 = scmp.eq.s32.totalorder %s14, 0
      %p55 = por %p53, %p54
      %p56 = scmp.ne.s32.totalorder %s48, %s50
      %p57 = scmp.eq.s32.totalorder %s19, 1
      %p58 = por %p56, %p57
      %p59 = scmp.ne.s32.totalorder %s50, %s51
      %p60 = scmp.eq.s32.totalorder %s19, 0
      %p61 = por %p59, %p60
      %p62 = scmp.ne.s32.totalorder %s50, %s51
      %p63 = scmp.eq.s32.totalorder %s20, 1
      %p64 = por %p62, %p63
      %p66 = scmp.ne.s32.totalorder %s51, %s65
      %p67 = scmp.eq.s32.totalorder %s20, 0
      %p68 = por %p66, %p67
      %s70 = sadd.s32 %s69, 1
      %p73 = scmp.eq.s32.totalorder %s14, 1
      %p74 = scmp.ne.s32.totalorder %s69, %s71
      %p75 = scmp.eq.s32.totalorder %s14, 0
      %p76 = por %p74, %p75
      %p77 = scmp.ne.s32.totalorder %s69, %s71
      %p78 = scmp.eq.s32.totalorder %s19, 1
      %p79 = por %p77, %p78
      %p80 = scmp.ne.s32.totalorder %s71, %s72
      %p81 = scmp.eq.s32.totalorder %s19, 0
      %p82 = por %p80, %p81
      %p83 = scmp.ne.s32.totalorder %s71, %s72
      %p84 = scmp.eq.s32.totalorder %s20, 1
      %p85 = por %p83, %p84
      %p87 = scmp.ne.s32.totalorder %s72, %s86
      %p88 = scmp.eq.s32.totalorder %s20, 0
      %p89 = por %p87, %p88
      %s91 = sadd.s32 %s90, 1
      %p94 = scmp.eq.s32.totalorder %s14, 1
      %p95 = scmp.ne.s32.totalorder %s90, %s92
      %p96 = scmp.eq.s32.totalorder %s14, 0
      %p97 = por %p95, %p96
      %p98 = scmp.ne.s32.totalorder %s90, %s92
      %p99 = scmp.eq.s32.totalorder %s19, 1
      %p100 = por %p98, %p99
      %p101 = scmp.ne.s32.totalorder %s92, %s93
      %p102 = scmp.eq.s32.totalorder %s19, 0
      %p103 = por %p101, %p102
      %p104 = scmp.ne.s32.totalorder %s92, %s93
      %p105 = scmp.eq.s32.totalorder %s20, 1
      %p106 = por %p104, %p105
      %p108 = scmp.ne.s32.totalorder %s93, %s107
      %p109 = scmp.eq.s32.totalorder %s20, 0
      %p110 = por %p108, %p109
      %s112 = sadd.s32 %s111, 1
      %p115 = scmp.eq.s32.totalorder %s14, 1
      %p116 = scmp.ne.s32.totalorder %s111, %s113
      %p117 = scmp.eq.s32.totalorder %s14, 0
      %p118 = por %p116, %p117
      %p119 = scmp.ne.s32.totalorder %s111, %s113
      %p120 = scmp.eq.s32.totalorder %s19, 1
      %p121 = por %p119, %p120
      %p122 = scmp.ne.s32.totalorder %s113, %s114
      %p123 = scmp.eq.s32.totalorder %s19, 0
      %p124 = por %p122, %p123
      %p125 = scmp.ne.s32.totalorder %s113, %s114
      %p126 = scmp.eq.s32.totalorder %s20, 1
      %p127 = por %p125, %p126
      %p129 = scmp.ne.s32.totalorder %s114, %s128
      %p130 = scmp.eq.s32.totalorder %s20, 0
      %p131 = por %p129, %p130
      %s133 = sadd.s32 %s132, 1
      %p136 = scmp.eq.s32.totalorder %s14, 1
      %p137 = scmp.ne.s32.totalorder %s132, %s134
      %p138 = scmp.eq.s32.totalorder %s14, 0
      %p139 = por %p137, %p138
      %p140 = scmp.ne.s32.totalorder %s132, %s134
      %p141 = scmp.eq.s32.totalorder %s19, 1
      %p142 = por %p140, %p141
      %p143 = scmp.ne.s32.totalorder %s134, %s135
      %p144 = scmp.eq.s32.totalorder %s19, 0
      %p145 = por %p143, %p144
      %p146 = scmp.ne.s32.totalorder %s134, %s135
      %p147 = scmp.eq.s32.totalorder %s20, 1
      %p148 = por %p146, %p147
      %p150 = scmp.ne.s32.totalorder %s135, %s149
      %p151 = scmp.eq.s32.totalorder %s20, 0
      %p152 = por %p150, %p151
      %s154 = sadd.s32 %s153, 1
      %p157 = scmp.eq.s32.totalorder %s14, 1
      %p158 = scmp.ne.s32.totalorder %s153, %s155
      %p159 = scmp.eq.s32.totalorder %s14, 0
      %p160 = por %p158, %p159
      %p161 = scmp.ne.s32.totalorder %s153, %s155
      %p162 = scmp.eq.s32.totalorder %s19, 1
      %p163 = por %p161, %p162
      %p164 = scmp.ne.s32.totalorder %s155, %s156
      %p165 = scmp.eq.s32.totalorder %s19, 0
      %p166 = por %p164, %p165
      %p167 = scmp.ne.s32.totalorder %s155, %s156
      %p168 = scmp.eq.s32.totalorder %s20, 1
      %p169 = por %p167, %p168
      %p171 = scmp.ne.s32.totalorder %s156, %s170
      %p172 = scmp.eq.s32.totalorder %s20, 0
      %p173 = por %p171, %p172
      %s174 = ssub.s32 %s14, %s21
      %p175 = scmp.eq.s32.totalorder %s174, 0
      %s177 = sadd.s32 %s176, 1
      %s178 = scalar_select %p175, %s176, %s177
      %p181 = pneg %p175
      %p182 = scmp.eq.s32.totalorder %s14, 1
      %p183 = por %p181, %p182
      %p184 = scmp.ne.s32.totalorder %s176, %s179
      %p185 = scmp.eq.s32.totalorder %s14, 0
      %p186 = por %p184, %p185
      %p187 = scmp.ne.s32.totalorder %s176, %s179
      %p188 = scmp.eq.s32.totalorder %s19, 1
      %p189 = por %p187, %p188
      %p190 = scmp.ne.s32.totalorder %s179, %s180
      %p191 = scmp.eq.s32.totalorder %s19, 0
      %p192 = por %p190, %p191
      %p193 = scmp.ne.s32.totalorder %s179, %s180
      %p194 = scmp.eq.s32.totalorder %s20, 1
      %p195 = por %p193, %p194
      %p197 = scmp.ne.s32.totalorder %s180, %s196
      %p198 = scmp.eq.s32.totalorder %s20, 0
      %p199 = por %p197, %p198
      %p200 = scmp.le.s32.totalorder 1, %s14
      %p201 = scmp.lt.s32.totalorder %s14, 3
      %p202 = pnand %p200, %p201
      %p203 = pneg %p202
      // Predicated region
      $region9: #{tpu_custom_call.1} parent=5 // pred_check
        _
      $region10: #{tpu_custom_call.1} parent=5 // pred_check_branch
        %205 = sbr.rel (%p202) target = $region12
      $region11: #{tpu_custom_call.1} parent=5 // pred_region
        %s206 = ssub.s32 %s14, 1
        // Predicated region
        $region13: #{tpu_custom_call.1} parent=11 // pred_check
          %p207 = pneg %p61
        $region14: #{tpu_custom_call.1} parent=11 // pred_check_branch
          %209 = sbr.rel (%p207) target = $region16
        $region15: #{tpu_custom_call.1} parent=11 // pred_region
          %s211 = ssub.s32 256, 256
          %212 = vsyncadd [#allocation3], %s211
          %s213 = sshll.u32 [#allocation2], 4
          %s214 = int_to_ptr.vmem [resolvable:$true] %s213
          %219 = dma.hbm_to_vmem [thread:$0]  %s1, 256, %s214, [#allocation3], 128, 128, 8
        $region16: #{tpu_custom_call.1} parent=11 // pred_fallthru
          _
        // Predicated region
        $region17: #{tpu_custom_call.1} parent=11 // pred_check
          %p220 = pneg %p82
        $region18: #{tpu_custom_call.1} parent=11 // pred_check_branch
          %222 = sbr.rel (%p220) target = $region20
        $region19: #{tpu_custom_call.1} parent=11 // pred_region
          _
        $region20: #{tpu_custom_call.1} parent=11 // pred_fallthru
          _
        // Predicated region
        $region21: #{tpu_custom_call.1} parent=11 // pred_check
          %p223 = pneg %p103
        $region22: #{tpu_custom_call.1} parent=11 // pred_check_branch
          %225 = sbr.rel (%p223) target = $region24
        $region23: #{tpu_custom_call.1} parent=11 // pred_region
          _
        $region24: #{tpu_custom_call.1} parent=11 // pred_fallthru
          _
        // Predicated region
        $region25: #{tpu_custom_call.1} parent=11 // pred_check
          %p226 = pneg %p124
        $region26: #{tpu_custom_call.1} parent=11 // pred_check_branch
          %228 = sbr.rel (%p226) target = $region28
        $region27: #{tpu_custom_call.1} parent=11 // pred_region
          _
        $region28: #{tpu_custom_call.1} parent=11 // pred_fallthru
          _
        // Predicated region
        $region29: #{tpu_custom_call.1} parent=11 // pred_check
          %p229 = pneg %p145
        $region30: #{tpu_custom_call.1} parent=11 // pred_check_branch
          %231 = sbr.rel (%p229) target = $region32
        $region31: #{tpu_custom_call.1} parent=11 // pred_region
          _
        $region32: #{tpu_custom_call.1} parent=11 // pred_fallthru
          _
        // Predicated region
        $region33: #{tpu_custom_call.1} parent=11 // pred_check
          %p232 = pneg %p166
        $region34: #{tpu_custom_call.1} parent=11 // pred_check_branch
          %234 = sbr.rel (%p232) target = $region36
        $region35: #{tpu_custom_call.1} parent=11 // pred_region
          _
        $region36: #{tpu_custom_call.1} parent=11 // pred_fallthru
          _
      $region12: #{tpu_custom_call.1} parent=5 // pred_fallthru
        _
      %p235 = scmp.lt.s32.totalorder %s14, 2
      // Predicated region
      $region37: #{tpu_custom_call.1} parent=5 // pred_check
        %p236 = pneg %p235
      $region38: #{tpu_custom_call.1} parent=5 // pred_check_branch
        %238 = sbr.rel (%p236) target = $region40
      $region39: #{tpu_custom_call.1} parent=5 // pred_region
        // Predicated region
        $region41: #{tpu_custom_call.1} parent=39 // pred_check
          %p239 = pneg %p34
        $region42: #{tpu_custom_call.1} parent=39 // pred_check_branch
          %241 = sbr.rel (%p239) target = $region44
        $region43: #{tpu_custom_call.1} parent=39 // pred_region
          %p242 = scmp.lt.s32.totalorder %s14, 1
          %s243 = scalar_select %p242, %s14, 1
          %s244 = smul.addr %s243, 8
          %s245 = scalar_lea.vmem %s0, %s244
        $region44: #{tpu_custom_call.1} parent=39 // pred_fallthru
          _
      $region40: #{tpu_custom_call.1} parent=5 // pred_fallthru
        _
      %p246 = scmp.le.s32.totalorder 1, %s14
      %p247 = scmp.lt.s32.totalorder %s14, 3
      %p248 = pnand %p246, %p247
      %p249 = pneg %p248
      // Predicated region
      $region45: #{tpu_custom_call.1} parent=5 // pred_check
        _
      $region46: #{tpu_custom_call.1} parent=5 // pred_check_branch
        %251 = sbr.rel (%p248) target = $region48
      $region47: #{tpu_custom_call.1} parent=5 // pred_region
        %s252 = ssub.s32 %s14, 1
        // Predicated region
        $region49: #{tpu_custom_call.1} parent=47 // pred_check
          %p253 = pneg %p61
        $region50: #{tpu_custom_call.1} parent=47 // pred_check_branch
          %255 = sbr.rel (%p253) target = $region52
        $region51: #{tpu_custom_call.1} parent=47 // pred_region
          %256 = dma.done [#allocation3], 256
        $region52: #{tpu_custom_call.1} parent=47 // pred_fallthru
          _
        %p257 = scmp.lt.s32.totalorder %s19, 1
        %s258 = scalar_select %p257, %s19, 1
        %s259 = smul.addr %s258, 8
        %s260 = scalar_lea.vmem %s0, %s259
        %p261 = pneg %p40
        %p262 = pneg %p37
        %p263 = pneg %p61
        %p264 = pneg %p58
        %p265 = pneg %p82
        %p266 = pneg %p79
        %p267 = pneg %p103
        %p268 = pneg %p100
        %p269 = pneg %p124
        %p270 = pneg %p121
        %p271 = pneg %p145
        %p272 = pneg %p142
        %p273 = pneg %p166
        %p274 = pneg %p163
        %p275 = pneg %p192
        %p276 = pneg %p189
        %p277 = scmp.lt.s32.totalorder %s19, 1
        %s278 = scalar_select %p277, %s19, 1
        %s279 = smul.addr %s278, 8
        %s280 = scalar_lea.vmem %s7, %s279
        %p281 = scmp.lt.s32.totalorder %s19, 1
        %s282 = scalar_select %p281, %s19, 1
        %s283 = smul.addr %s282, 8
        %s284 = scalar_lea.vmem %s0, %s283
        %p285 = scmp.lt.s32.totalorder %s19, 1
        %s286 = scalar_select %p285, %s19, 1
        %s287 = smul.addr %s286, 8
        %s288 = scalar_lea.vmem %s7, %s287
        %v289 = vld [vmem:[%s284] sm:$0xff]
        %v290 = vld [vmem:[#allocation2] sm:$0xff]
        %v291 = vld [vmem:[#allocation2 + $0x8] sm:$0xff]
        %vm292 = vcmask 130048
        %v294 = vsel %vm292, %v289, 0
        %296 = vmatprep.subr.mxu0 0.0
        %297 = vmatpush1.msra.mxu0 %v290
        %298 = vmatprep.subr.mxu0 0.0
        %299 = vmatpush1.msra.mxu0 %v291
        %300 = vmatprep.subr.mxu0 0.0
        %301 = vmatpush1.msra.mxu0 0.0
        %302 = vmatprep.subr.mxu0 0.0
        %303 = vmatpush1.msra.mxu0 0.0
        %304 = vmatprep.subr.mxu0 0.0
        %305 = vmatpush1.msra.mxu0 0.0
        %306 = vmatprep.subr.mxu0 0.0
        %307 = vmatpush1.msra.mxu0 0.0
        %308 = vmatprep.subr.mxu0 0.0
        %309 = vmatpush1.msra.mxu0 0.0
        %310 = vmatprep.subr.mxu0 0.0
        %311 = vmatpush1.msra.mxu0 0.0
        %312 = vmatprep.subr.mxu0 0.0
        %313 = vmatpush1.msra.mxu0 0.0
        %314 = vmatprep.subr.mxu0 0.0
        %315 = vmatpush1.msra.mxu0 0.0
        %316 = vmatprep.subr.mxu0 0.0
        %317 = vmatpush1.msra.mxu0 0.0
        %318 = vmatprep.subr.mxu0 0.0
        %319 = vmatpush1.msra.mxu0 0.0
        %320 = vmatprep.subr.mxu0 0.0
        %321 = vmatpush1.msra.mxu0 0.0
        %322 = vmatprep.subr.mxu0 0.0
        %323 = vmatpush1.msra.mxu0 0.0
        %324 = vmatprep.subr.mxu0 0.0
        %325 = vmatpush1.msra.mxu0 0.0
        %326 = vmatprep.subr.mxu0 0.0
        %327 = vmatpush1.msra.mxu0 0.0
        %328 = vmatprep.subr.mxu0 0.0
        %329 = vmatpush1.msra.mxu0 0.0
        %330 = vmatprep.subr.mxu0 0.0
        %331 = vmatpush1.msra.mxu0 0.0
        %332 = vmatprep.subr.mxu0 0.0
        %333 = vmatpush1.msra.mxu0 0.0
        %334 = vmatprep.subr.mxu0 0.0
        %335 = vmatpush1.msra.mxu0 0.0
        %336 = vmatprep.subr.mxu0 0.0
        %337 = vmatpush1.msra.mxu0 0.0
        %338 = vmatprep.subr.mxu0 0.0
        %339 = vmatpush1.msra.mxu0 0.0
        %340 = vmatprep.subr.mxu0 0.0
        %341 = vmatpush1.msra.mxu0 0.0
        %342 = vmatprep.subr.mxu0 0.0
        %343 = vmatpush1.msra.mxu0 0.0
        %344 = vmatprep.subr.mxu0 0.0
        %345 = vmatpush1.msra.mxu0 0.0
        %346 = vmatprep.subr.mxu0 0.0
        %347 = vmatpush1.msra.mxu0 0.0
        %348 = vmatprep.subr.mxu0 0.0
        %349 = vmatpush1.msra.mxu0 0.0
        %350 = vmatprep.subr.mxu0 0.0
        %351 = vmatpush1.msra.mxu0 0.0
        %352 = vmatprep.subr.mxu0 0.0
        %353 = vmatpush1.msra.mxu0 0.0
        %354 = vmatprep.subr.mxu0 0.0
        %355 = vmatpush1.msra.mxu0 0.0
        %356 = vmatprep.subr.mxu0 0.0
        %357 = vmatpush1.msra.mxu0 0.0
        %358 = vmatprep.subr.mxu0 0.0
        %359 = vmatpush1.msra.mxu0 0.0
        %360 = vmatprep.mubr.f32.mxu0 0.0
        %361 = vmatmul.mubr.f32.gmra.mrb[0].mxu0 %v294
        %v362 = vpop.f32.mrb[0].mxu0
        %v363 = vadd.f32 0.0, %v362
        %v364 = vpop.f32.mrb[0].mxu0
        %365 = vdwg.mxu0
        %v366 = vld [vmem:[%s2] sm:$0x1]
        %v368 = vlaneseq
        %v369 = vshrl.u32 %v368, 7
        %v370 = vsub.s32 0, %v369
        %v371 = vrot.slane %v366, %v370
        %v373 = vadd.f32 %v363, %v371
        %v374 = vmax.f32 %v373, 0.0
        %v375 = vld [vmem:[%s3] sm:$0xff]
        %v376 = vld [vmem:[%s3 + $0x8] sm:$0xff]
        %v377 = vld [vmem:[%s3 + $0x10] sm:$0xff]
        %v378 = vld [vmem:[%s3 + $0x18] sm:$0xff]
        %v379 = vld [vmem:[%s4] sm:$0x1]
        %v381 = vlaneseq
        %v382 = vshrl.u32 %v381, 7
        %v383 = vsub.s32 0, %v382
        %v384 = vrot.slane %v379, %v383
        %vm386 = vcmask 261120
        %v388 = vsel %vm386, %v374, 0
        %390 = vmatprep.subr.mxu0 0.0
        %391 = vmatpush1.msra.mxu0 %v375
        %392 = vmatprep.subr.mxu0 0.0
        %393 = vmatpush1.msra.mxu0 %v376
        %394 = vmatprep.subr.mxu0 0.0
        %395 = vmatpush1.msra.mxu0 %v377
        %396 = vmatprep.subr.mxu0 0.0
        %397 = vmatpush1.msra.mxu0 %v378
        %398 = vmatprep.subr.mxu0 0.0
        %399 = vmatpush1.msra.mxu0 0.0
        %400 = vmatprep.subr.mxu0 0.0
        %401 = vmatpush1.msra.mxu0 0.0
        %402 = vmatprep.subr.mxu0 0.0
        %403 = vmatpush1.msra.mxu0 0.0
        %404 = vmatprep.subr.mxu0 0.0
        %405 = vmatpush1.msra.mxu0 0.0
        %406 = vmatprep.subr.mxu0 0.0
        %407 = vmatpush1.msra.mxu0 0.0
        %408 = vmatprep.subr.mxu0 0.0
        %409 = vmatpush1.msra.mxu0 0.0
        %410 = vmatprep.subr.mxu0 0.0
        %411 = vmatpush1.msra.mxu0 0.0
        %412 = vmatprep.subr.mxu0 0.0
        %413 = vmatpush1.msra.mxu0 0.0
        %414 = vmatprep.subr.mxu0 0.0
        %415 = vmatpush1.msra.mxu0 0.0
        %416 = vmatprep.subr.mxu0 0.0
        %417 = vmatpush1.msra.mxu0 0.0
        %418 = vmatprep.subr.mxu0 0.0
        %419 = vmatpush1.msra.mxu0 0.0
        %420 = vmatprep.subr.mxu0 0.0
        %421 = vmatpush1.msra.mxu0 0.0
        %422 = vmatprep.subr.mxu0 0.0
        %423 = vmatpush1.msra.mxu0 0.0
        %424 = vmatprep.subr.mxu0 0.0
        %425 = vmatpush1.msra.mxu0 0.0
        %426 = vmatprep.subr.mxu0 0.0
        %427 = vmatpush1.msra.mxu0 0.0
        %428 = vmatprep.subr.mxu0 0.0
        %429 = vmatpush1.msra.mxu0 0.0
        %430 = vmatprep.subr.mxu0 0.0
        %431 = vmatpush1.msra.mxu0 0.0
        %432 = vmatprep.subr.mxu0 0.0
        %433 = vmatpush1.msra.mxu0 0.0
        %434 = vmatprep.subr.mxu0 0.0
        %435 = vmatpush1.msra.mxu0 0.0
        %436 = vmatprep.subr.mxu0 0.0
        %437 = vmatpush1.msra.mxu0 0.0
        %438 = vmatprep.subr.mxu0 0.0
        %439 = vmatpush1.msra.mxu0 0.0
        %440 = vmatprep.subr.mxu0 0.0
        %441 = vmatpush1.msra.mxu0 0.0
        %442 = vmatprep.subr.mxu0 0.0
        %443 = vmatpush1.msra.mxu0 0.0
        %444 = vmatprep.subr.mxu0 0.0
        %445 = vmatpush1.msra.mxu0 0.0
        %446 = vmatprep.subr.mxu0 0.0
        %447 = vmatpush1.msra.mxu0 0.0
        %448 = vmatprep.subr.mxu0 0.0
        %449 = vmatpush1.msra.mxu0 0.0
        %450 = vmatprep.subr.mxu0 0.0
        %451 = vmatpush1.msra.mxu0 0.0
        %452 = vmatprep.subr.mxu0 0.0
        %453 = vmatpush1.msra.mxu0 0.0
        %454 = vmatprep.mubr.f32.mxu0 0.0
        %455 = vmatmul.mubr.f32.gmra.mrb[0].mxu0 %v388
        %v456 = vpop.f32.mrb[0].mxu0
        %v457 = vadd.f32 %v384, %v456
        %v458 = vpop.f32.mrb[0].mxu0
        %459 = vdwg.mxu0
        %v460 = vmax.f32 %v457, 0.0
        %v461 = vld [vmem:[%s5] sm:$0xff]
        %v462 = vld [vmem:[%s5 + $0x8] sm:$0xff]
        %v463 = vld [vmem:[%s5 + $0x10] sm:$0xff]
        %v464 = vld [vmem:[%s5 + $0x18] sm:$0xff]
        %v466 = vsel %vm386, %v460, 0
        %468 = vmatprep.subr.mxu0 0.0
        %469 = vmatpush1.msra.mxu0 %v461
        %470 = vmatprep.subr.mxu0 0.0
        %471 = vmatpush1.msra.mxu0 %v462
        %472 = vmatprep.subr.mxu0 0.0
        %473 = vmatpush1.msra.mxu0 %v463
        %474 = vmatprep.subr.mxu0 0.0
        %475 = vmatpush1.msra.mxu0 %v464
        %476 = vmatprep.subr.mxu0 0.0
        %477 = vmatpush1.msra.mxu0 0.0
        %478 = vmatprep.subr.mxu0 0.0
        %479 = vmatpush1.msra.mxu0 0.0
        %480 = vmatprep.subr.mxu0 0.0
        %481 = vmatpush1.msra.mxu0 0.0
        %482 = vmatprep.subr.mxu0 0.0
        %483 = vmatpush1.msra.mxu0 0.0
        %484 = vmatprep.subr.mxu0 0.0
        %485 = vmatpush1.msra.mxu0 0.0
        %486 = vmatprep.subr.mxu0 0.0
        %487 = vmatpush1.msra.mxu0 0.0
        %488 = vmatprep.subr.mxu0 0.0
        %489 = vmatpush1.msra.mxu0 0.0
        %490 = vmatprep.subr.mxu0 0.0
        %491 = vmatpush1.msra.mxu0 0.0
        %492 = vmatprep.subr.mxu0 0.0
        %493 = vmatpush1.msra.mxu0 0.0
        %494 = vmatprep.subr.mxu0 0.0
        %495 = vmatpush1.msra.mxu0 0.0
        %496 = vmatprep.subr.mxu0 0.0
        %497 = vmatpush1.msra.mxu0 0.0
        %498 = vmatprep.subr.mxu0 0.0
        %499 = vmatpush1.msra.mxu0 0.0
        %500 = vmatprep.subr.mxu0 0.0
        %501 = vmatpush1.msra.mxu0 0.0
        %502 = vmatprep.subr.mxu0 0.0
        %503 = vmatpush1.msra.mxu0 0.0
        %504 = vmatprep.subr.mxu0 0.0
        %505 = vmatpush1.msra.mxu0 0.0
        %506 = vmatprep.subr.mxu0 0.0
        %507 = vmatpush1.msra.mxu0 0.0
        %508 = vmatprep.subr.mxu0 0.0
        %509 = vmatpush1.msra.mxu0 0.0
        %510 = vmatprep.subr.mxu0 0.0
        %511 = vmatpush1.msra.mxu0 0.0
        %512 = vmatprep.subr.mxu0 0.0
        %513 = vmatpush1.msra.mxu0 0.0
        %514 = vmatprep.subr.mxu0 0.0
        %515 = vmatpush1.msra.mxu0 0.0
        %516 = vmatprep.subr.mxu0 0.0
        %517 = vmatpush1.msra.mxu0 0.0
        %518 = vmatprep.subr.mxu0 0.0
        %519 = vmatpush1.msra.mxu0 0.0
        %520 = vmatprep.subr.mxu0 0.0
        %521 = vmatpush1.msra.mxu0 0.0
        %522 = vmatprep.subr.mxu0 0.0
        %523 = vmatpush1.msra.mxu0 0.0
        %524 = vmatprep.subr.mxu0 0.0
        %525 = vmatpush1.msra.mxu0 0.0
        %526 = vmatprep.subr.mxu0 0.0
        %527 = vmatpush1.msra.mxu0 0.0
        %528 = vmatprep.subr.mxu0 0.0
        %529 = vmatpush1.msra.mxu0 0.0
        %530 = vmatprep.subr.mxu0 0.0
        %531 = vmatpush1.msra.mxu0 0.0
        %532 = vmatprep.mubr.f32.mxu0 0.0
        %533 = vmatmul.mubr.f32.gmra.mrb[0].mxu0 %v466
        %v534 = vpop.f32.mrb[0].mxu0
        %v535 = vadd.f32 0.0, %v534
        %v536 = vpop.f32.mrb[0].mxu0
        %537 = vdwg.mxu0
        %539 = vrot.lane.b32.xlu0 %v535, 32
        %v540 = vpop.permute.xlu0 %539
        %v542 = vadd.f32 %v363, %v540
        %v543 = vld [vmem:[%s6] sm:$0x1]
        %v545 = vlaneseq
        %v546 = vshrl.u32 %v545, 7
        %v547 = vsub.s32 0, %v546
        %v548 = vrot.slane %v543, %v547
        %549 = vrot.lane.b32.xlu0 %v548, 32
        %v550 = vpop.permute.xlu0 %549
        %v552 = vadd.f32 %v542, %v550
        %554 = vrot.lane.b32.xlu0 %v552, 96
        %v555 = vpop.permute.xlu0 %554
        %vm557 = vcmask 64512
        %558 = vst.msk [vmem:[%s288] sm:$0xff] %vm557, %v555
        %p559 = scmp.lt.s32.totalorder %s19, 1
        %s560 = scalar_select %p559, %s19, 1
        %s561 = smul.addr %s560, 8
        %s562 = scalar_lea.vmem %s7, %s561
        // Predicated region
        $region53: #{tpu_custom_call.1} parent=47 // pred_check
          %p563 = pneg %p189
        $region54: #{tpu_custom_call.1} parent=47 // pred_check_branch
          %565 = sbr.rel (%p563) target = $region56
        $region55: #{tpu_custom_call.1} parent=47 // pred_region
          _
        $region56: #{tpu_custom_call.1} parent=47 // pred_fallthru
          _
      $region48: #{tpu_custom_call.1} parent=5 // pred_fallthru
        _
      %p566 = scmp.le.s32.totalorder 2, %s14
      // Predicated region
      $region57: #{tpu_custom_call.1} parent=5 // pred_check
        %p567 = pneg %p566
      $region58: #{tpu_custom_call.1} parent=5 // pred_check_branch
        %569 = sbr.rel (%p567) target = $region60
      $region59: #{tpu_custom_call.1} parent=5 // pred_region
        %s570 = ssub.s32 %s14, 2
        // Predicated region
        $region61: #{tpu_custom_call.1} parent=59 // pred_check
          %p571 = pneg %p195
        $region62: #{tpu_custom_call.1} parent=59 // pred_check_branch
          %573 = sbr.rel (%p571) target = $region64
        $region63: #{tpu_custom_call.1} parent=59 // pred_region
          %p574 = scmp.lt.s32.totalorder %s20, 1
          %s575 = scalar_select %p574, %s20, 1
          %s576 = smul.addr %s575, 8
          %s577 = scalar_lea.vmem %s7, %s576
        $region64: #{tpu_custom_call.1} parent=59 // pred_fallthru
          _
      $region60: #{tpu_custom_call.1} parent=5 // pred_fallthru
        _
    $region6: #{tpu_custom_call.1} parent=1 // loop_footer
      %s18 = sadd.s32 1, %s14
    $region7: #{tpu_custom_call.1} parent=1 // loop_footer_branch
      %13 = sbr.rel target = $region3
    $region8: #{tpu_custom_call.1} parent=1 // loop_exit
      _
    %578 = vsyncpa [#allocation3], 1
    %s579 = scalar_lea.sflag [#allocation3], 1
    %580 = vsyncpa %s579, 1

</llo_original>
